<compile_context>
chip_gen: v5e
topology: v5e:2x2
jax: 0.10.0
libtpu: 0.0.40
codegen_flags: <defaults>
</compile_context>

<pallas_src>
import functools

import jax
import jax.numpy as jnp
import numpy as np
from jax import lax
from jax.experimental import pallas as pl
from jax.experimental.pallas import tpu as pltpu


def _dilated_cnn_kernel(x_ref, w1_ref, w2a_ref, w2b_ref, w2c_ref, w3_ref,
                        b1_ref, b2_ref, b3_ref, o_ref, h1e_ref, *, dilation):
    """One (batch-group, L-tile) step in channels-first [C, L] layout.

    x_ref/o_ref : (Bb, Ce, Lt)     L on the lane axis (lane-dense loads/stores)
    h1e_ref     : (Bb, Ci, Lt+2d)  layer-1 activations with a 2d-column left halo
    weights     : w1 (Ci,Ce), w2a/b/c (Ci,Ci), w3 (Ce,Ci) — BN scales folded in
    biases      : (Ci,1)/(Ce,1) f32 folded BN shifts, lane-broadcast in the adds
    """
    d = dilation
    pad = 2 * d
    Bb, Ce, Lt = x_ref.shape
    Ci = w1_ref.shape[0]
    j = pl.program_id(1)

    # First L tile of each batch group: zero the 2d-column halo (this is the
    # zero pre-padding of the reference module).
    @pl.when(j == 0)
    def _():
        h1e_ref[:, :, 0:pad] = jnp.zeros((Bb, Ci, pad), h1e_ref.dtype)

    # Hoist the tiny weight / bias loads out of the per-batch loop.
    w1 = w1_ref[...]
    w2a = w2a_ref[...]
    w2b = w2b_ref[...]
    w2c = w2c_ref[...]
    w3 = w3_ref[...]
    b1 = b1_ref[...]      # (Ci, 1) f32
    b2 = b2_ref[...]      # (Ci, 1) f32
    b3 = b3_ref[...]      # (Ce, 1) f32

    for b in range(Bb):   # static unroll; block_b is kept small by the wrapper
        xb = x_ref[b]                                             # (Ce, Lt)

        # ---- layer 1: 1x1 conv (BN scale folded) + bias + ReLU; dropout = id ----
        h1 = jnp.dot(w1, xb, preferred_element_type=jnp.float32)  # (Ci, Lt) f32
        h1 = jnp.maximum(h1 + b1, 0.0)
        h1e_ref[b, :, pad:pad + Lt] = h1.astype(h1e_ref.dtype)

        # ---- layer 2: (1,3) dilated conv; taps at t-2d / t-d / t are lane
        # slices of the halo-extended layer-1 scratch (XLU shifts, no concat) ----
        he = h1e_ref[b]                                           # (Ci, Lt+2d)
        h2 = jnp.dot(w2a, he[:, 0:Lt], preferred_element_type=jnp.float32)
        h2 = h2 + jnp.dot(w2b, he[:, d:d + Lt], preferred_element_type=jnp.float32)
        h2 = h2 + jnp.dot(w2c, he[:, pad:pad + Lt], preferred_element_type=jnp.float32)
        h2 = jnp.maximum(h2 + b2, 0.0)                            # f32

        # ---- layer 3: 1x1 conv (BN scale folded) + bias + residual + ReLU ----
        h3 = jnp.dot(w3, h2.astype(w3.dtype), preferred_element_type=jnp.float32)
        res = h3 + b3 + xb.astype(jnp.float32)
        o_ref[b] = jnp.maximum(res, 0.0).astype(o_ref.dtype)

    # Carry: last 2d columns of this tile's layer-1 output become the next
    # tile's halo (sequential "arbitrary" L axis).
    @pl.when(j + 1 < pl.num_programs(1))
    def _():
        h1e_ref[:, :, 0:pad] = h1e_ref[:, :, Lt:Lt + pad]


# --------------------------- tile sizing helpers ---------------------------
def _vmem_capacity_bytes():
    try:
        return int(pltpu.get_tpu_info().vmem_capacity_bytes)
    except Exception:
        return 128 << 20


def _per_col_bytes(Ce, Ci, itemsize):
    # Per output column, per batch: x + out blocks (double-buffered) + h1 halo
    # scratch + in-flight f32 temporaries (h1 / h2 / taps).
    return 4 * Ce * itemsize + Ci * itemsize + 6 * Ci * 4


def _pick_block_l(L, pad, max_cols):
    """Largest L tile that is a multiple of 128 (lane dim), divides L, covers
    the halo and fits the VMEM-derived column budget; else the full L."""
    if L <= max_cols or L % 128 != 0:
        return L
    cap = max(128, (max_cols // 128) * 128)
    for cand in range(cap, 127, -128):
        if L % cand == 0 and cand >= pad:
            return cand
    return L


def _pick_block_b(B, per_batch_bytes, budget_bytes, max_unroll=16):
    cap = int(max(1, min(max_unroll, budget_bytes // max(per_batch_bytes, 1))))
    for cand in range(min(B, cap), 0, -1):
        if B % cand == 0:
            return cand
    return 1


# -------------------------------- wrapper ----------------------------------
def dilated_cnn_forward(x_bcl, w1, w2a, w2b, w2c, w3, b1, b2, b3, *, dilation,
                        block_l=None, block_b=None, vmem_budget_bytes=None):
    """x_bcl: [B, Ce, L] channels-first (the PyTorch NCHW input with H squeezed).

    Weights carry the folded BN scales; biases are the folded BN shifts ((C,1),
    f32).  Output has the same shape/dtype as x_bcl.
    """
    B, Ce, L = x_bcl.shape
    Ci = w1.shape[0]
    d = dilation
    pad = 2 * d
    cdtype = x_bcl.dtype
    isz = jnp.dtype(cdtype).itemsize

    vmem_cap = _vmem_capacity_bytes()
    if vmem_budget_bytes is None:
        # Working-set budget for sizing tiles (not the compiler limit); leaves
        # ample headroom on every generation (v7x has only 64 MiB physical).
        vmem_budget_bytes = min(12 << 20, vmem_cap // 5)

    per_col = _per_col_bytes(Ce, Ci, isz)
    if block_l is None:
        block_l = _pick_block_l(L, pad, max(128, vmem_budget_bytes // per_col))
    assert L % block_l == 0, "block_l must divide L"
    n_l = L // block_l
    if n_l > 1:
        assert block_l >= pad, "L tile must cover the 2*dilation halo"
        assert block_l % 128 == 0, "tiled lane dim must be a multiple of 128"

    per_batch = per_col * block_l + Ci * pad * isz
    if block_b is None:
        block_b = _pick_block_b(B, per_batch, vmem_budget_bytes)
    assert B % block_b == 0, "block_b must divide B"
    n_b = B // block_b

    # Compiler VMEM limit from the actual blocks, with headroom, capped well
    # below physical VMEM (important on v7x where physical VMEM is 64 MiB).
    xo_blk = block_b * Ce * block_l * isz
    scratch_bytes = block_b * Ci * (block_l + pad) * isz
    weight_bytes = (Ci * Ce + 3 * Ci * Ci + Ce * Ci) * isz + (2 * Ci + Ce) * 4
    temp_bytes = block_b * 6 * Ci * block_l * 4
    need = 4 * xo_blk + scratch_bytes + 2 * weight_bytes + temp_bytes
    headroom_cap = min(48 << 20, vmem_cap - (16 << 20))
    vmem_limit = max(8 << 20, min(int(1.4 * need) + (2 << 20), headroom_cap))

    flops = 2 * B * L * (Ce * Ci + 3 * Ci * Ci + Ci * Ce)
    bytes_accessed = 2 * B * Ce * L * isz + weight_bytes

    kernel = functools.partial(_dilated_cnn_kernel, dilation=d)
    return pl.pallas_call(
        kernel,
        out_shape=jax.ShapeDtypeStruct((B, Ce, L), cdtype),
        grid_spec=pltpu.PrefetchScalarGridSpec(
            num_scalar_prefetch=0,
            grid=(n_b, n_l),
            in_specs=[
                pl.BlockSpec((block_b, Ce, block_l), lambda g, j: (g, 0, j)),  # x
                pl.BlockSpec((Ci, Ce), lambda g, j: (0, 0)),                   # W1*s1
                pl.BlockSpec((Ci, Ci), lambda g, j: (0, 0)),                   # W2[...,0]*s2 (tap t-2d)
                pl.BlockSpec((Ci, Ci), lambda g, j: (0, 0)),                   # W2[...,1]*s2 (tap t-d)
                pl.BlockSpec((Ci, Ci), lambda g, j: (0, 0)),                   # W2[...,2]*s2 (tap t)
                pl.BlockSpec((Ce, Ci), lambda g, j: (0, 0)),                   # W3*s3
                pl.BlockSpec((Ci, 1), lambda g, j: (0, 0)),                    # bn1 bias
                pl.BlockSpec((Ci, 1), lambda g, j: (0, 0)),                    # bn2 bias
                pl.BlockSpec((Ce, 1), lambda g, j: (0, 0)),                    # bn3 bias
            ],
            out_specs=pl.BlockSpec((block_b, Ce, block_l), lambda g, j: (g, 0, j)),
            scratch_shapes=[pltpu.VMEM((block_b, Ci, block_l + pad), cdtype)],
        ),
        compiler_params=pltpu.CompilerParams(
            dimension_semantics=("parallel", "arbitrary"),
            vmem_limit_bytes=vmem_limit,
        ),
        cost_estimate=pl.CostEstimate(flops=flops, transcendentals=0,
                                      bytes_accessed=bytes_accessed),
    )(x_bcl, w1, w2a, w2b, w2c, w3, b1, b2, b3)


def prepare_params(w1_t, w2_t, w3_t, bn1, bn2, bn3, eps=1e-5, dtype=jnp.float32):
    """Fold BN running stats into the conv weights (scale) and biases (shift).

    Torch OIHW weights -> channels-first matrices: w1 (Ci,Ce), w2a/b/c (Ci,Ci)
    for taps [t-2d, t-d, t], w3 (Ce,Ci).  Biases stay f32, shaped (C, 1).
    """
    def fold(gamma, beta, mean, var):
        scale = gamma / jnp.sqrt(var + eps)
        return scale, beta - mean * scale

    s1, b1 = fold(*bn1)
    s2, b2 = fold(*bn2)
    s3, b3 = fold(*bn3)
    w1 = (w1_t[:, :, 0, 0] * s1[:, None]).astype(dtype)     # (Ci, Ce)
    w2a = (w2_t[:, :, 0, 0] * s2[:, None]).astype(dtype)    # (Ci, Ci) tap t-2d
    w2b = (w2_t[:, :, 0, 1] * s2[:, None]).astype(dtype)    # (Ci, Ci) tap t-d
    w2c = (w2_t[:, :, 0, 2] * s2[:, None]).astype(dtype)    # (Ci, Ci) tap t
    w3 = (w3_t[:, :, 0, 0] * s3[:, None]).astype(dtype)     # (Ce, Ci)
    return w1, w2a, w2b, w2c, w3, b1[:, None], b2[:, None], b3[:, None]


# ---------------- pure-JAX reference (mirrors the PyTorch NCHW forward) ----------------
def ref_forward_nchw(x, w1_t, w2_t, w3_t, bn1, bn2, bn3, dilation):
    eps = 1e-5
    dn = ('NCHW', 'OIHW', 'NCHW')

    def bn(y, gamma, beta, mean, var):
        g = gamma[None, :, None, None]
        b = beta[None, :, None, None]
        m = mean[None, :, None, None]
        v = var[None, :, None, None]
        return (y - m) / jnp.sqrt(v + eps) * g + b

    c1 = lax.conv_general_dilated(x, w1_t, (1, 1), 'VALID', dimension_numbers=dn)
    c1 = jax.nn.relu(bn(c1, *bn1))
    pad = 2 * dilation
    padz = jnp.zeros((c1.shape[0], c1.shape[1], 1, pad), c1.dtype)
    c1p = jnp.concatenate([padz, c1, padz], axis=3)
    c2 = lax.conv_general_dilated(c1p, w2_t, (1, 1), 'VALID',
                                  rhs_dilation=(1, dilation), dimension_numbers=dn)
    c2 = c2[:, :, :, :-pad]
    c2 = jax.nn.relu(bn(c2, *bn2))
    c3 = lax.conv_general_dilated(c2, w3_t, (1, 1), 'VALID', dimension_numbers=dn)
    c3 = bn(c3, *bn3)
    return jax.nn.relu(c3 + x)


if __name__ == "__main__":
    def run_case(key, B, Ce, Ci, L, dilation, block_l=None,
                 dtype=jnp.float32, rtol=1e-4, atol=1e-4):
        ks = jax.random.split(key, 7)
        # Input in PyTorch layout: [batch, cnn_exter, 1, seq_len - 1]
        x_nchw = jax.random.normal(ks[0], (B, Ce, 1, L), jnp.float32)
        # Kaiming-normal conv weights, torch OIHW layout.
        w1_t = jax.random.normal(ks[1], (Ci, Ce, 1, 1), jnp.float32) * np.sqrt(2.0 / Ce)
        w2_t = jax.random.normal(ks[2], (Ci, Ci, 1, 3), jnp.float32) * np.sqrt(2.0 / (Ci * 3))
        w3_t = jax.random.normal(ks[3], (Ce, Ci, 1, 1), jnp.float32) * np.sqrt(2.0 / Ci)

        # Non-trivial BN running stats / affine params to exercise the fold.
        def bn_params(c, k):
            kg, kb, km, kv = jax.random.split(k, 4)
            return (1.0 + 0.1 * jax.random.normal(kg, (c,), jnp.float32),
                    0.1 * jax.random.normal(kb, (c,), jnp.float32),
                    0.1 * jax.random.normal(km, (c,), jnp.float32),
                    jnp.abs(1.0 + 0.1 * jax.random.normal(kv, (c,), jnp.float32)))

        bn1, bn2, bn3 = bn_params(Ci, ks[4]), bn_params(Ci, ks[5]), bn_params(Ce, ks[6])

        w1, w2a, w2b, w2c, w3, b1, b2, b3 = prepare_params(
            w1_t, w2_t, w3_t, bn1, bn2, bn3, dtype=dtype)
        # Channels-first [B, Ce, L]: the NCHW input with H squeezed (no transpose).
        x_bcl = x_nchw[:, :, 0, :].astype(dtype)

        out = dilated_cnn_forward(x_bcl, w1, w2a, w2b, w2c, w3, b1, b2, b3,
                                  dilation=dilation, block_l=block_l)
        out = jax.block_until_ready(out)

        ref = ref_forward_nchw(x_nchw, w1_t, w2_t, w3_t, bn1, bn2, bn3, dilation)
        ref_bcl = ref[:, :, 0, :]
        np.testing.assert_allclose(np.asarray(jnp.asarray(out, jnp.float32)),
                                   np.asarray(ref_bcl), rtol=rtol, atol=atol)

    root = jax.random.PRNGKey(0)
    # Primary small case: externel_size=8, internel_size=16, seq_len-1=16, dilation=2.
    # Single L tile, both batches packed into one grid step; exact f32 parity.
    run_case(jax.random.fold_in(root, 0), B=2, Ce=8, Ci=16, L=16, dilation=2)
    # Tiled-L case: exercises the halo carry across 4 sequential 128-wide L tiles.
    run_case(jax.random.fold_in(root, 1), B=2, Ce=8, Ci=16, L=512, dilation=3,
             block_l=128)
    # bf16 HBM-traffic path (v6e/v7x lever); f32 accumulation / element-wise,
    # compared against the f32 reference with loose tolerance.
    run_case(jax.random.fold_in(root, 2), B=2, Ce=8, Ci=16, L=16, dilation=2,
             dtype=jnp.bfloat16, rtol=0.1, atol=0.15)

    print("KERNEL_OK")
</pallas_src>

<mosaic_0001>
module attributes {stable_mosaic.version = 11 : i64} {
  func.func @_dilated_cnn_kernel(%arg0: i32, %arg1: i32, %arg2: memref<2x8x16xf32, #tpu.memory_space<vmem>>, %arg3: memref<16x8xf32, #tpu.memory_space<vmem>>, %arg4: memref<16x16xf32, #tpu.memory_space<vmem>>, %arg5: memref<16x16xf32, #tpu.memory_space<vmem>>, %arg6: memref<16x16xf32, #tpu.memory_space<vmem>>, %arg7: memref<8x16xf32, #tpu.memory_space<vmem>>, %arg8: memref<16x1xf32, #tpu.memory_space<vmem>>, %arg9: memref<16x1xf32, #tpu.memory_space<vmem>>, %arg10: memref<8x1xf32, #tpu.memory_space<vmem>>, %arg11: memref<2x8x16xf32, #tpu.memory_space<vmem>>, %arg12: memref<2x16x20xf32, #tpu.memory_space<vmem>>) attributes {dimension_semantics = [#tpu.dimension_semantics<parallel>, #tpu.dimension_semantics<arbitrary>], iteration_bounds = array<i64: 1, 1>, scalar_prefetch = 0 : i64, scratch_operands = 1 : i64, tpu.core_type = #tpu.core_type<tc>, window_params = [{transform_indices = @transform_0, window_bounds = array<i64: 2, 8, 16>}, {pipeline_mode = #tpu.pipeline_mode<synchronous>, transform_indices = @transform_1, window_bounds = array<i64: 16, 8>}, {pipeline_mode = #tpu.pipeline_mode<synchronous>, transform_indices = @transform_2, window_bounds = array<i64: 16, 16>}, {pipeline_mode = #tpu.pipeline_mode<synchronous>, transform_indices = @transform_3, window_bounds = array<i64: 16, 16>}, {pipeline_mode = #tpu.pipeline_mode<synchronous>, transform_indices = @transform_4, window_bounds = array<i64: 16, 16>}, {pipeline_mode = #tpu.pipeline_mode<synchronous>, transform_indices = @transform_5, window_bounds = array<i64: 8, 16>}, {pipeline_mode = #tpu.pipeline_mode<synchronous>, transform_indices = @transform_6, window_bounds = array<i64: 16, 1>}, {pipeline_mode = #tpu.pipeline_mode<synchronous>, transform_indices = @transform_7, window_bounds = array<i64: 16, 1>}, {pipeline_mode = #tpu.pipeline_mode<synchronous>, transform_indices = @transform_8, window_bounds = array<i64: 8, 1>}, {transform_indices = @transform_9, window_bounds = array<i64: 2, 8, 16>}]} {
    %c0_i32 = arith.constant 0 : i32
    %0 = arith.cmpi eq, %arg1, %c0_i32 : i32
    %1 = arith.extui %0 : i1 to i32
    %c0_i32_0 = arith.constant 0 : i32
    %2 = arith.cmpi ne, %1, %c0_i32_0 : i32
    scf.if %2 {
      %cst_55 = arith.constant 0.000000e+00 : f32
      %81 = vector.broadcast %cst_55 : f32 to vector<2x16x4xf32>
      %c0_56 = arith.constant 0 : index
      %c0_57 = arith.constant 0 : index
      %c0_58 = arith.constant 0 : index
      %82 = vector.load %arg12[%c0_56, %c0_57, %c0_58] : memref<2x16x20xf32, #tpu.memory_space<vmem>>, vector<2x16x4xf32>
      tpu.vector_store %arg12[%c0_56, %c0_57, %c0_58], %81 {strides = array<i32>} : memref<2x16x20xf32, #tpu.memory_space<vmem>>, vector<2x16x4xf32>,
    } else {
    }
    %c0 = arith.constant 0 : index
    %c0_1 = arith.constant 0 : index
    %3 = vector.load %arg3[%c0, %c0_1] : memref<16x8xf32, #tpu.memory_space<vmem>>, vector<16x8xf32>
    %c0_2 = arith.constant 0 : index
    %c0_3 = arith.constant 0 : index
    %4 = vector.load %arg4[%c0_2, %c0_3] : memref<16x16xf32, #tpu.memory_space<vmem>>, vector<16x16xf32>
    %c0_4 = arith.constant 0 : index
    %c0_5 = arith.constant 0 : index
    %5 = vector.load %arg5[%c0_4, %c0_5] : memref<16x16xf32, #tpu.memory_space<vmem>>, vector<16x16xf32>
    %c0_6 = arith.constant 0 : index
    %c0_7 = arith.constant 0 : index
    %6 = vector.load %arg6[%c0_6, %c0_7] : memref<16x16xf32, #tpu.memory_space<vmem>>, vector<16x16xf32>
    %c0_8 = arith.constant 0 : index
    %c0_9 = arith.constant 0 : index
    %7 = vector.load %arg7[%c0_8, %c0_9] : memref<8x16xf32, #tpu.memory_space<vmem>>, vector<8x16xf32>
    %c0_10 = arith.constant 0 : index
    %c0_11 = arith.constant 0 : index
    %8 = vector.load %arg8[%c0_10, %c0_11] : memref<16x1xf32, #tpu.memory_space<vmem>>, vector<16x1xf32>
    %c0_12 = arith.constant 0 : index
    %c0_13 = arith.constant 0 : index
    %9 = vector.load %arg9[%c0_12, %c0_13] : memref<16x1xf32, #tpu.memory_space<vmem>>, vector<16x1xf32>
    %c0_14 = arith.constant 0 : index
    %c0_15 = arith.constant 0 : index
    %10 = vector.load %arg10[%c0_14, %c0_15] : memref<8x1xf32, #tpu.memory_space<vmem>>, vector<8x1xf32>
    %c0_16 = arith.constant 0 : index
    %c0_17 = arith.constant 0 : index
    %c0_18 = arith.constant 0 : index
    %11 = vector.load %arg2[%c0_16, %c0_17, %c0_18] : memref<2x8x16xf32, #tpu.memory_space<vmem>>, vector<1x8x16xf32>
    %12 = vector.shape_cast %11 : vector<1x8x16xf32> to vector<8x16xf32>
    %cst = arith.constant dense<0.000000e+00> : vector<16x16xf32>
    %13 = tpu.matmul %3, %12, %cst {dimension_numbers = #tpu.dot_dimension_numbers<[1], [0], [0], [1], [0, 0, 1, 1], [], []>} : vector<16x8xf32>, vector<8x16xf32>, vector<16x16xf32> -> vector<16x16xf32>
    %14 = vector.broadcast %8 : vector<16x1xf32> to vector<16x16xf32>
    %15 = arith.addf %13, %14 : vector<16x16xf32>
    %cst_19 = arith.constant 0.000000e+00 : f32
    %16 = vector.broadcast %cst_19 : f32 to vector<16x16xf32>
    %17 = arith.maximumf %15, %16 : vector<16x16xf32>
    %c0_20 = arith.constant 0 : index
    %c0_21 = arith.constant 0 : index
    %c4 = arith.constant 4 : index
    %18 = vector.load %arg12[%c0_20, %c0_21, %c4] : memref<2x16x20xf32, #tpu.memory_space<vmem>>, vector<1x16x16xf32>
    %19 = vector.shape_cast %18 : vector<1x16x16xf32> to vector<16x16xf32>
    %20 = vector.shape_cast %17 : vector<16x16xf32> to vector<1x16x16xf32>
    tpu.vector_store %arg12[%c0_20, %c0_21, %c4], %20 {strides = array<i32>} : memref<2x16x20xf32, #tpu.memory_space<vmem>>, vector<1x16x16xf32>,
    %c0_22 = arith.constant 0 : index
    %c0_23 = arith.constant 0 : index
    %c0_24 = arith.constant 0 : index
    %21 = vector.load %arg12[%c0_22, %c0_23, %c0_24] : memref<2x16x20xf32, #tpu.memory_space<vmem>>, vector<1x16x20xf32>
    %22 = vector.shape_cast %21 : vector<1x16x20xf32> to vector<16x20xf32>
    %23 = vector.extract_strided_slice %22 {offsets = [0, 0], sizes = [16, 16], strides = [1, 1]} : vector<16x20xf32> to vector<16x16xf32>
    %cst_25 = arith.constant dense<0.000000e+00> : vector<16x16xf32>
    %24 = tpu.matmul %4, %23, %cst_25 {dimension_numbers = #tpu.dot_dimension_numbers<[1], [0], [0], [1], [0, 0, 1, 1], [], []>} : vector<16x16xf32>, vector<16x16xf32>, vector<16x16xf32> -> vector<16x16xf32>
    %25 = vector.extract_strided_slice %22 {offsets = [0, 2], sizes = [16, 16], strides = [1, 1]} : vector<16x20xf32> to vector<16x16xf32>
    %cst_26 = arith.constant dense<0.000000e+00> : vector<16x16xf32>
    %26 = tpu.matmul %5, %25, %cst_26 {dimension_numbers = #tpu.dot_dimension_numbers<[1], [0], [0], [1], [0, 0, 1, 1], [], []>} : vector<16x16xf32>, vector<16x16xf32>, vector<16x16xf32> -> vector<16x16xf32>
    %27 = arith.addf %24, %26 : vector<16x16xf32>
    %28 = vector.extract_strided_slice %22 {offsets = [0, 4], sizes = [16, 16], strides = [1, 1]} : vector<16x20xf32> to vector<16x16xf32>
    %cst_27 = arith.constant dense<0.000000e+00> : vector<16x16xf32>
    %29 = tpu.matmul %6, %28, %cst_27 {dimension_numbers = #tpu.dot_dimension_numbers<[1], [0], [0], [1], [0, 0, 1, 1], [], []>} : vector<16x16xf32>, vector<16x16xf32>, vector<16x16xf32> -> vector<16x16xf32>
    %30 = arith.addf %27, %29 : vector<16x16xf32>
    %31 = vector.broadcast %9 : vector<16x1xf32> to vector<16x16xf32>
    %32 = arith.addf %30, %31 : vector<16x16xf32>
    %cst_28 = arith.constant 0.000000e+00 : f32
    %33 = vector.broadcast %cst_28 : f32 to vector<16x16xf32>
    %34 = arith.maximumf %32, %33 : vector<16x16xf32>
    %cst_29 = arith.constant dense<0.000000e+00> : vector<8x16xf32>
    %35 = tpu.matmul %7, %34, %cst_29 {dimension_numbers = #tpu.dot_dimension_numbers<[1], [0], [0], [1], [0, 0, 1, 1], [], []>} : vector<8x16xf32>, vector<16x16xf32>, vector<8x16xf32> -> vector<8x16xf32>
    %36 = vector.broadcast %10 : vector<8x1xf32> to vector<8x16xf32>
    %37 = arith.addf %35, %36 : vector<8x16xf32>
    %38 = arith.addf %37, %12 : vector<8x16xf32>
    %cst_30 = arith.constant 0.000000e+00 : f32
    %39 = vector.broadcast %cst_30 : f32 to vector<8x16xf32>
    %40 = arith.maximumf %38, %39 : vector<8x16xf32>
    %c0_31 = arith.constant 0 : index
    %c0_32 = arith.constant 0 : index
    %c0_33 = arith.constant 0 : index
    %41 = vector.load %arg11[%c0_31, %c0_32, %c0_33] : memref<2x8x16xf32, #tpu.memory_space<vmem>>, vector<1x8x16xf32>
    %42 = vector.shape_cast %41 : vector<1x8x16xf32> to vector<8x16xf32>
    %43 = vector.shape_cast %40 : vector<8x16xf32> to vector<1x8x16xf32>
    tpu.vector_store %arg11[%c0_31, %c0_32, %c0_33], %43 {strides = array<i32>} : memref<2x8x16xf32, #tpu.memory_space<vmem>>, vector<1x8x16xf32>,
    %c1 = arith.constant 1 : index
    %c0_34 = arith.constant 0 : index
    %c0_35 = arith.constant 0 : index
    %44 = vector.load %arg2[%c1, %c0_34, %c0_35] : memref<2x8x16xf32, #tpu.memory_space<vmem>>, vector<1x8x16xf32>
    %45 = vector.shape_cast %44 : vector<1x8x16xf32> to vector<8x16xf32>
    %cst_36 = arith.constant dense<0.000000e+00> : vector<16x16xf32>
    %46 = tpu.matmul %3, %45, %cst_36 {dimension_numbers = #tpu.dot_dimension_numbers<[1], [0], [0], [1], [0, 0, 1, 1], [], []>} : vector<16x8xf32>, vector<8x16xf32>, vector<16x16xf32> -> vector<16x16xf32>
    %47 = vector.broadcast %8 : vector<16x1xf32> to vector<16x16xf32>
    %48 = arith.addf %46, %47 : vector<16x16xf32>
    %cst_37 = arith.constant 0.000000e+00 : f32
    %49 = vector.broadcast %cst_37 : f32 to vector<16x16xf32>
    %50 = arith.maximumf %48, %49 : vector<16x16xf32>
    %c1_38 = arith.constant 1 : index
    %c0_39 = arith.constant 0 : index
    %c4_40 = arith.constant 4 : index
    %51 = vector.load %arg12[%c1_38, %c0_39, %c4_40] : memref<2x16x20xf32, #tpu.memory_space<vmem>>, vector<1x16x16xf32>
    %52 = vector.shape_cast %51 : vector<1x16x16xf32> to vector<16x16xf32>
    %53 = vector.shape_cast %50 : vector<16x16xf32> to vector<1x16x16xf32>
    tpu.vector_store %arg12[%c1_38, %c0_39, %c4_40], %53 {strides = array<i32>} : memref<2x16x20xf32, #tpu.memory_space<vmem>>, vector<1x16x16xf32>,
    %c1_41 = arith.constant 1 : index
    %c0_42 = arith.constant 0 : index
    %c0_43 = arith.constant 0 : index
    %54 = vector.load %arg12[%c1_41, %c0_42, %c0_43] : memref<2x16x20xf32, #tpu.memory_space<vmem>>, vector<1x16x20xf32>
    %55 = vector.shape_cast %54 : vector<1x16x20xf32> to vector<16x20xf32>
    %56 = vector.extract_strided_slice %55 {offsets = [0, 0], sizes = [16, 16], strides = [1, 1]} : vector<16x20xf32> to vector<16x16xf32>
    %cst_44 = arith.constant dense<0.000000e+00> : vector<16x16xf32>
    %57 = tpu.matmul %4, %56, %cst_44 {dimension_numbers = #tpu.dot_dimension_numbers<[1], [0], [0], [1], [0, 0, 1, 1], [], []>} : vector<16x16xf32>, vector<16x16xf32>, vector<16x16xf32> -> vector<16x16xf32>
    %58 = vector.extract_strided_slice %55 {offsets = [0, 2], sizes = [16, 16], strides = [1, 1]} : vector<16x20xf32> to vector<16x16xf32>
    %cst_45 = arith.constant dense<0.000000e+00> : vector<16x16xf32>
    %59 = tpu.matmul %5, %58, %cst_45 {dimension_numbers = #tpu.dot_dimension_numbers<[1], [0], [0], [1], [0, 0, 1, 1], [], []>} : vector<16x16xf32>, vector<16x16xf32>, vector<16x16xf32> -> vector<16x16xf32>
    %60 = arith.addf %57, %59 : vector<16x16xf32>
    %61 = vector.extract_strided_slice %55 {offsets = [0, 4], sizes = [16, 16], strides = [1, 1]} : vector<16x20xf32> to vector<16x16xf32>
    %cst_46 = arith.constant dense<0.000000e+00> : vector<16x16xf32>
    %62 = tpu.matmul %6, %61, %cst_46 {dimension_numbers = #tpu.dot_dimension_numbers<[1], [0], [0], [1], [0, 0, 1, 1], [], []>} : vector<16x16xf32>, vector<16x16xf32>, vector<16x16xf32> -> vector<16x16xf32>
    %63 = arith.addf %60, %62 : vector<16x16xf32>
    %64 = vector.broadcast %9 : vector<16x1xf32> to vector<16x16xf32>
    %65 = arith.addf %63, %64 : vector<16x16xf32>
    %cst_47 = arith.constant 0.000000e+00 : f32
    %66 = vector.broadcast %cst_47 : f32 to vector<16x16xf32>
    %67 = arith.maximumf %65, %66 : vector<16x16xf32>
    %cst_48 = arith.constant dense<0.000000e+00> : vector<8x16xf32>
    %68 = tpu.matmul %7, %67, %cst_48 {dimension_numbers = #tpu.dot_dimension_numbers<[1], [0], [0], [1], [0, 0, 1, 1], [], []>} : vector<8x16xf32>, vector<16x16xf32>, vector<8x16xf32> -> vector<8x16xf32>
    %69 = vector.broadcast %10 : vector<8x1xf32> to vector<8x16xf32>
    %70 = arith.addf %68, %69 : vector<8x16xf32>
    %71 = arith.addf %70, %45 : vector<8x16xf32>
    %cst_49 = arith.constant 0.000000e+00 : f32
    %72 = vector.broadcast %cst_49 : f32 to vector<8x16xf32>
    %73 = arith.maximumf %71, %72 : vector<8x16xf32>
    %c1_50 = arith.constant 1 : index
    %c0_51 = arith.constant 0 : index
    %c0_52 = arith.constant 0 : index
    %74 = vector.load %arg11[%c1_50, %c0_51, %c0_52] : memref<2x8x16xf32, #tpu.memory_space<vmem>>, vector<1x8x16xf32>
    %75 = vector.shape_cast %74 : vector<1x8x16xf32> to vector<8x16xf32>
    %76 = vector.shape_cast %73 : vector<8x16xf32> to vector<1x8x16xf32>
    tpu.vector_store %arg11[%c1_50, %c0_51, %c0_52], %76 {strides = array<i32>} : memref<2x8x16xf32, #tpu.memory_space<vmem>>, vector<1x8x16xf32>,
    %c1_i32 = arith.constant 1 : i32
    %77 = arith.addi %arg1, %c1_i32 : i32
    %c1_i32_53 = arith.constant 1 : i32
    %78 = arith.cmpi slt, %77, %c1_i32_53 : i32
    %79 = arith.extui %78 : i1 to i32
    %c0_i32_54 = arith.constant 0 : i32
    %80 = arith.cmpi ne, %79, %c0_i32_54 : i32
    scf.if %80 {
      %c0_55 = arith.constant 0 : index
      %c0_56 = arith.constant 0 : index
      %c16 = arith.constant 16 : index
      %81 = vector.load %arg12[%c0_55, %c0_56, %c16] : memref<2x16x20xf32, #tpu.memory_space<vmem>>, vector<2x16x4xf32>
      %c0_57 = arith.constant 0 : index
      %c0_58 = arith.constant 0 : index
      %c0_59 = arith.constant 0 : index
      %82 = vector.load %arg12[%c0_57, %c0_58, %c0_59] : memref<2x16x20xf32, #tpu.memory_space<vmem>>, vector<2x16x4xf32>
      tpu.vector_store %arg12[%c0_57, %c0_58, %c0_59], %81 {strides = array<i32>} : memref<2x16x20xf32, #tpu.memory_space<vmem>>, vector<2x16x4xf32>,
    } else {
    }
    return
  }
  func.func @transform_0(%arg0: i32, %arg1: i32) -> (i32, i32, i32) {
    %c0_i32 = arith.constant 0 : i32
    %c0_i32_0 = arith.constant 0 : i32
    return %arg0, %c0_i32, %arg1 : i32, i32, i32
  }
  func.func @transform_1(%arg0: i32, %arg1: i32) -> (i32, i32) {
    %c0_i32 = arith.constant 0 : i32
    %c0_i32_0 = arith.constant 0 : i32
    %c0_i32_1 = arith.constant 0 : i32
    return %c0_i32, %c0_i32_0 : i32, i32
  }
  func.func @transform_2(%arg0: i32, %arg1: i32) -> (i32, i32) {
    %c0_i32 = arith.constant 0 : i32
    %c0_i32_0 = arith.constant 0 : i32
    %c0_i32_1 = arith.constant 0 : i32
    return %c0_i32, %c0_i32_0 : i32, i32
  }
  func.func @transform_3(%arg0: i32, %arg1: i32) -> (i32, i32) {
    %c0_i32 = arith.constant 0 : i32
    %c0_i32_0 = arith.constant 0 : i32
    %c0_i32_1 = arith.constant 0 : i32
    return %c0_i32, %c0_i32_0 : i32, i32
  }
  func.func @transform_4(%arg0: i32, %arg1: i32) -> (i32, i32) {
    %c0_i32 = arith.constant 0 : i32
    %c0_i32_0 = arith.constant 0 : i32
    %c0_i32_1 = arith.constant 0 : i32
    return %c0_i32, %c0_i32_0 : i32, i32
  }
  func.func @transform_5(%arg0: i32, %arg1: i32) -> (i32, i32) {
    %c0_i32 = arith.constant 0 : i32
    %c0_i32_0 = arith.constant 0 : i32
    %c0_i32_1 = arith.constant 0 : i32
    return %c0_i32, %c0_i32_0 : i32, i32
  }
  func.func @transform_6(%arg0: i32, %arg1: i32) -> (i32, i32) {
    %c0_i32 = arith.constant 0 : i32
    %c0_i32_0 = arith.constant 0 : i32
    %c0_i32_1 = arith.constant 0 : i32
    return %c0_i32, %c0_i32_0 : i32, i32
  }
  func.func @transform_7(%arg0: i32, %arg1: i32) -> (i32, i32) {
    %c0_i32 = arith.constant 0 : i32
    %c0_i32_0 = arith.constant 0 : i32
    %c0_i32_1 = arith.constant 0 : i32
    return %c0_i32, %c0_i32_0 : i32, i32
  }
  func.func @transform_8(%arg0: i32, %arg1: i32) -> (i32, i32) {
    %c0_i32 = arith.constant 0 : i32
    %c0_i32_0 = arith.constant 0 : i32
    %c0_i32_1 = arith.constant 0 : i32
    return %c0_i32, %c0_i32_0 : i32, i32
  }
  func.func @transform_9(%arg0: i32, %arg1: i32) -> (i32, i32, i32) {
    %c0_i32 = arith.constant 0 : i32
    %c0_i32_0 = arith.constant 0 : i32
    return %arg0, %c0_i32, %arg1 : i32, i32, i32
  }
}

</mosaic_0001>

<llo_original>
// kernel: tpu_custom_call.1
$region0: #{tpu_custom_call.1}
  #allocation0 [shape = 'u32[]', space=smem, size = 0x4, offset = 0x4, fixed_abs, tag = 'smem constant byte address 0x4 - core index']
  #allocation1 [shape = 'u32[72,128]{1,0:T(1,128)}', space=vmem, size = 0x9000, scoped, tag = 'internal scratch']
  #allocation2 [shape = 'f32[2,16,20]{2,1,0:T(8,128)}', space=vmem, size = 0x4000, scoped, tag = 'scratch operand']
  %s0 = inlined_call_operand.vmem [shape: f32[2,8,16], index: 0, kind: input, shape index: {}]
  %s1 = inlined_call_operand.vmem [shape: f32[16,8], index: 1, kind: input, shape index: {}]
  %s2 = inlined_call_operand.vmem [shape: f32[16,16], index: 2, kind: input, shape index: {}]
  %s3 = inlined_call_operand.vmem [shape: f32[16,16], index: 3, kind: input, shape index: {}]
  %s4 = inlined_call_operand.vmem [shape: f32[16,16], index: 4, kind: input, shape index: {}]
  %s5 = inlined_call_operand.hbm [shape: f32[8,16], index: 5, kind: input, shape index: {}]
  %s6 = inlined_call_operand.vmem [shape: f32[16,1], index: 6, kind: input, shape index: {}]
  %s7 = inlined_call_operand.vmem [shape: f32[16,1], index: 7, kind: input, shape index: {}]
  %s8 = inlined_call_operand.vmem [shape: f32[8,1], index: 8, kind: input, shape index: {}]
  %s9 = inlined_call_operand.hbm [shape: f32[2,8,16], index: 9, kind: output, shape index: {}]
  %s10 = sld [smem:[#allocation0]]
  $region58: #{tpu_custom_call.1} parent=0
    _
  %s12 = ssub.s32 1, %s10
  %s13 = scalar_select 0, %s12, %s10
  $region1: #{tpu_custom_call.1} parent=0
    #allocation3 [shape = 'u8[4096]{0}', space=vmem, size = 0x1000, scoped, tag = 'input window, operand 5, single buffered']
    #allocation4 [shape = 's32[1]{0}', space=sflag, size = 0x4, scoped, tag = 'scoped memory for tpu_custom_call.1']
    #allocation5 [shape = 's32[1]{0}', space=sflag, size = 0x4, scoped, tag = 'scoped memory for tpu_custom_call.1']
    #allocation6 [shape = 'u8[8192]{0}', space=vmem, size = 0x2000, scoped, tag = 'output window, operand 0, single buffered']
    %14 = vsyncpa [#allocation4], 0
    %15 = vsyncpa [#allocation5], 0
    // Predicated region
    $region2: #{tpu_custom_call.1} parent=1 // pred_check
      _
    $region3: #{tpu_custom_call.1} parent=1 // pred_check_branch
      %17 = sbr.rel (0) target = $region5
    $region4: #{tpu_custom_call.1} parent=1 // pred_region
      _
    $region5: #{tpu_custom_call.1} parent=1 // pred_fallthru
      _
    // Predicated region
    $region6: #{tpu_custom_call.1} parent=1 // pred_check
      _
    $region7: #{tpu_custom_call.1} parent=1 // pred_check_branch
      %19 = sbr.rel (0) target = $region9
    $region8: #{tpu_custom_call.1} parent=1 // pred_region
      _
    $region9: #{tpu_custom_call.1} parent=1 // pred_fallthru
      _
    // Predicated region
    $region10: #{tpu_custom_call.1} parent=1 // pred_check
      _
    $region11: #{tpu_custom_call.1} parent=1 // pred_check_branch
      %21 = sbr.rel (0) target = $region13
    $region12: #{tpu_custom_call.1} parent=1 // pred_region
      _
    $region13: #{tpu_custom_call.1} parent=1 // pred_fallthru
      _
    // Predicated region
    $region14: #{tpu_custom_call.1} parent=1 // pred_check
      _
    $region15: #{tpu_custom_call.1} parent=1 // pred_check_branch
      %23 = sbr.rel (0) target = $region17
    $region16: #{tpu_custom_call.1} parent=1 // pred_region
      _
    $region17: #{tpu_custom_call.1} parent=1 // pred_fallthru
      _
    // Predicated region
    $region18: #{tpu_custom_call.1} parent=1 // pred_check
      _
    $region19: #{tpu_custom_call.1} parent=1 // pred_check_branch
      %25 = sbr.rel (0) target = $region21
    $region20: #{tpu_custom_call.1} parent=1 // pred_region
      _
    $region21: #{tpu_custom_call.1} parent=1 // pred_fallthru
      _
    // Predicated region
    $region22: #{tpu_custom_call.1} parent=1 // pred_check
      _
    $region23: #{tpu_custom_call.1} parent=1 // pred_check_branch
      %27 = sbr.rel (0) target = $region25
    $region24: #{tpu_custom_call.1} parent=1 // pred_region
      %29 = vsyncadd [#allocation4], 0
      %s31 = sshll.u32 %s5, 4
      %s32 = int_to_ptr.hbm [resolvable:$true] %s31
      %s33 = sshll.u32 [#allocation3], 4
      %s34 = int_to_ptr.vmem [resolvable:$true] %s33
      %36 = dma.hbm_to_vmem [thread:$0]  %s32, 128, %s34, [#allocation4]
    $region25: #{tpu_custom_call.1} parent=1 // pred_fallthru
      _
    // Predicated region
    $region26: #{tpu_custom_call.1} parent=1 // pred_check
      _
    $region27: #{tpu_custom_call.1} parent=1 // pred_check_branch
      %38 = sbr.rel (0) target = $region29
    $region28: #{tpu_custom_call.1} parent=1 // pred_region
      _
    $region29: #{tpu_custom_call.1} parent=1 // pred_fallthru
      _
    // Predicated region
    $region30: #{tpu_custom_call.1} parent=1 // pred_check
      _
    $region31: #{tpu_custom_call.1} parent=1 // pred_check_branch
      %40 = sbr.rel (0) target = $region33
    $region32: #{tpu_custom_call.1} parent=1 // pred_region
      _
    $region33: #{tpu_custom_call.1} parent=1 // pred_fallthru
      _
    // Predicated region
    $region34: #{tpu_custom_call.1} parent=1 // pred_check
      _
    $region35: #{tpu_custom_call.1} parent=1 // pred_check_branch
      %42 = sbr.rel (0) target = $region37
    $region36: #{tpu_custom_call.1} parent=1 // pred_region
      _
    $region37: #{tpu_custom_call.1} parent=1 // pred_fallthru
      _
    // Predicated region
    $region38: #{tpu_custom_call.1} parent=1 // pred_check
      _
    $region39: #{tpu_custom_call.1} parent=1 // pred_check_branch
      %44 = sbr.rel (0) target = $region41
    $region40: #{tpu_custom_call.1} parent=1 // pred_region
      %46 = dma.done [#allocation4], 128
    $region41: #{tpu_custom_call.1} parent=1 // pred_fallthru
      _
    %p47 = scmp.eq.s32.totalorder 0, 0
    // Predicated region
    $region42: #{tpu_custom_call.1} parent=1 // pred_check
      %p48 = pneg %p47
    $region43: #{tpu_custom_call.1} parent=1 // pred_check_branch
      %50 = sbr.rel (%p48) target = $region45
    $region44: #{tpu_custom_call.1} parent=1 // pred_region
      %vm51 = vcmask 31744
      %52 = vst.msk [vmem:[#allocation2] sm:$0xff] %vm51, 0.0
      %53 = vst.msk [vmem:[#allocation2 + $0x8] sm:$0xff] %vm51, 0.0
      %54 = vst.msk [vmem:[#allocation2 + $0x10] sm:$0xff] %vm51, 0.0
      %55 = vst.msk [vmem:[#allocation2 + $0x18] sm:$0xff] %vm51, 0.0
    $region45: #{tpu_custom_call.1} parent=1 // pred_fallthru
      _
    %v56 = vld [vmem:[%s1] sm:$0xff]
    %v57 = vld [vmem:[%s1 + $0x8] sm:$0xff]
    %v58 = vld [vmem:[%s2] sm:$0xff]
    %v59 = vld [vmem:[%s2 + $0x8] sm:$0xff]
    %v60 = vld [vmem:[%s3] sm:$0xff]
    %v61 = vld [vmem:[%s3 + $0x8] sm:$0xff]
    %v62 = vld [vmem:[%s4] sm:$0xff]
    %v63 = vld [vmem:[%s4 + $0x8] sm:$0xff]
    %v64 = vld [vmem:[#allocation3] sm:$0xff]
    %v65 = vld [vmem:[%s6] sm:$0xff]
    %v66 = vld [vmem:[%s6 + $0x8] sm:$0xff]
    %v67 = vld [vmem:[%s7] sm:$0xff]
    %v68 = vld [vmem:[%s7 + $0x8] sm:$0xff]
    %v69 = vld [vmem:[%s8] sm:$0xff]
    %v70 = vld [vmem:[%s0] sm:$0xff]
    %72 = vset.pattern.permute.xlu0 0
    %73 = vperm.xlu0 %72, %v65
    %v74 = vpop.permute.xlu0 %73
    %77 = vset.pattern.permute.xlu0 0
    %78 = vperm.xlu0 %77, %v66
    %v79 = vpop.permute.xlu0 %78
    %vm81 = vcmask 64512
    %v83 = vsel %vm81, %v56, 0
    %v86 = vsel %vm81, %v57, 0
    %88 = vmatpush.msra.mxu0 0.0
    %89 = vmatpush.msra.mxu0 0.0
    %90 = vmatpush.msra.mxu0 0.0
    %91 = vmatpush.msra.mxu0 0.0
    %92 = vmatpush.msra.mxu0 0.0
    %93 = vmatpush.msra.mxu0 0.0
    %94 = vmatpush.msra.mxu0 0.0
    %95 = vmatpush.msra.mxu0 0.0
    %96 = vmatpush.msra.mxu0 0.0
    %97 = vmatpush.msra.mxu0 0.0
    %98 = vmatpush.msra.mxu0 0.0
    %99 = vmatpush.msra.mxu0 0.0
    %100 = vmatpush.msra.mxu0 0.0
    %101 = vmatpush.msra.mxu0 0.0
    %102 = vmatpush.msra.mxu0 0.0
    %103 = vmatpush.msra.mxu0 %v70
    %104 = vmatmul.f32.gmra.mxu0 %v83
    %v105 = vpop.f32.mrf.mxu0
    %v106 = vadd.f32 %v74, %v105
    %107 = vmatmul.f32.gmra.mxu0 %v86
    %v108 = vpop.f32.mrf.mxu0
    %v109 = vadd.f32 %v79, %v108
    %110 = vdwg.mxu0
    %v111 = vmax.f32 %v106, 0.0
    %v112 = vmax.f32 %v109, 0.0
    %115 = vrot.lane.b32.xlu0 %v111, 4
    %v116 = vpop.permute.xlu0 %115
    %117 = vrot.lane.b32.xlu0 %v112, 4
    %v118 = vpop.permute.xlu0 %117
    %vm121 = vcmask 162848
    %122 = vst.msk [vmem:[#allocation2] sm:$0xff] %vm121, %v116
    %123 = vst.msk [vmem:[#allocation2 + $0x8] sm:$0xff] %vm121, %v118
    %v124 = vld [vmem:[#allocation2] sm:$0xff]
    %v125 = vld [vmem:[#allocation2 + $0x8] sm:$0xff]
    %128 = vrot.lane.b32.xlu0 %v124, 126
    %v129 = vpop.permute.xlu0 %128
    %130 = vrot.lane.b32.xlu0 %v125, 126
    %v131 = vpop.permute.xlu0 %130
    %vm134 = vcmask 130048
    %v136 = vsel %vm134, %v60, 0
    %v139 = vsel %vm134, %v61, 0
    %141 = vmatpush.msra.mxu0 0.0
    %142 = vmatpush.msra.mxu0 0.0
    %143 = vmatpush.msra.mxu0 0.0
    %144 = vmatpush.msra.mxu0 0.0
    %145 = vmatpush.msra.mxu0 0.0
    %146 = vmatpush.msra.mxu0 0.0
    %147 = vmatpush.msra.mxu0 0.0
    %148 = vmatpush.msra.mxu0 0.0
    %149 = vmatpush.msra.mxu0 0.0
    %150 = vmatpush.msra.mxu0 0.0
    %151 = vmatpush.msra.mxu0 0.0
    %152 = vmatpush.msra.mxu0 0.0
    %153 = vmatpush.msra.mxu0 0.0
    %154 = vmatpush.msra.mxu0 0.0
    %155 = vmatpush.msra.mxu0 %v131
    %156 = vmatpush.msra.mxu0 %v129
    %157 = vmatmul.f32.gmra.mxu0 %v136
    %v158 = vpop.f32.mrf.mxu0
    %v159 = vadd.f32 0.0, %v158
    %160 = vmatmul.f32.gmra.mxu0 %v139
    %v161 = vpop.f32.mrf.mxu0
    %v162 = vadd.f32 0.0, %v161
    %163 = vdwg.mxu0
    %v165 = vsel %vm134, %v58, 0
    %v168 = vsel %vm134, %v59, 0
    %170 = vmatpush.msra.mxu0 0.0
    %171 = vmatpush.msra.mxu0 0.0
    %172 = vmatpush.msra.mxu0 0.0
    %173 = vmatpush.msra.mxu0 0.0
    %174 = vmatpush.msra.mxu0 0.0
    %175 = vmatpush.msra.mxu0 0.0
    %176 = vmatpush.msra.mxu0 0.0
    %177 = vmatpush.msra.mxu0 0.0
    %178 = vmatpush.msra.mxu0 0.0
    %179 = vmatpush.msra.mxu0 0.0
    %180 = vmatpush.msra.mxu0 0.0
    %181 = vmatpush.msra.mxu0 0.0
    %182 = vmatpush.msra.mxu0 0.0
    %183 = vmatpush.msra.mxu0 0.0
    %184 = vmatpush.msra.mxu0 %v125
    %185 = vmatpush.msra.mxu0 %v124
    %186 = vmatmul.f32.gmra.mxu0 %v165
    %v187 = vpop.f32.mrf.mxu0
    %v188 = vadd.f32 %v159, %v187
    %189 = vmatmul.f32.gmra.mxu0 %v168
    %v190 = vpop.f32.mrf.mxu0
    %v191 = vadd.f32 %v162, %v190
    %192 = vdwg.mxu0
    %193 = vrot.lane.b32.xlu0 %v124, 124
    %v194 = vpop.permute.xlu0 %193
    %195 = vrot.lane.b32.xlu0 %v125, 124
    %v196 = vpop.permute.xlu0 %195
    %v200 = vsel %vm134, %v62, 0
    %v203 = vsel %vm134, %v63, 0
    %205 = vmatpush.msra.mxu0 0.0
    %206 = vmatpush.msra.mxu0 0.0
    %207 = vmatpush.msra.mxu0 0.0
    %208 = vmatpush.msra.mxu0 0.0
    %209 = vmatpush.msra.mxu0 0.0
    %210 = vmatpush.msra.mxu0 0.0
    %211 = vmatpush.msra.mxu0 0.0
    %212 = vmatpush.msra.mxu0 0.0
    %213 = vmatpush.msra.mxu0 0.0
    %214 = vmatpush.msra.mxu0 0.0
    %215 = vmatpush.msra.mxu0 0.0
    %216 = vmatpush.msra.mxu0 0.0
    %217 = vmatpush.msra.mxu0 0.0
    %218 = vmatpush.msra.mxu0 0.0
    %219 = vmatpush.msra.mxu0 %v196
    %220 = vmatpush.msra.mxu0 %v194
    %221 = vmatmul.f32.gmra.mxu0 %v200
    %v222 = vpop.f32.mrf.mxu0
    %v223 = vadd.f32 0.0, %v222
    %224 = vmatmul.f32.gmra.mxu0 %v203
    %v225 = vpop.f32.mrf.mxu0
    %v226 = vadd.f32 0.0, %v225
    %227 = vdwg.mxu0
    %v228 = vadd.f32 %v188, %v223
    %v229 = vadd.f32 %v191, %v226
    %231 = vset.pattern.permute.xlu0 0
    %232 = vperm.xlu0 %231, %v67
    %v233 = vpop.permute.xlu0 %232
    %236 = vset.pattern.permute.xlu0 0
    %237 = vperm.xlu0 %236, %v68
    %v238 = vpop.permute.xlu0 %237
    %v240 = vadd.f32 %v228, %v233
    %v241 = vadd.f32 %v229, %v238
    %v242 = vmax.f32 %v240, 0.0
    %v243 = vmax.f32 %v241, 0.0
    %245 = vset.pattern.permute.xlu0 0
    %246 = vperm.xlu0 %245, %v69
    %v247 = vpop.permute.xlu0 %246
    %v250 = vsel %vm134, %v64, 0
    %252 = vmatpush.msra.mxu0 0.0
    %253 = vmatpush.msra.mxu0 0.0
    %254 = vmatpush.msra.mxu0 0.0
    %255 = vmatpush.msra.mxu0 0.0
    %256 = vmatpush.msra.mxu0 0.0
    %257 = vmatpush.msra.mxu0 0.0
    %258 = vmatpush.msra.mxu0 0.0
    %259 = vmatpush.msra.mxu0 0.0
    %260 = vmatpush.msra.mxu0 0.0
    %261 = vmatpush.msra.mxu0 0.0
    %262 = vmatpush.msra.mxu0 0.0
    %263 = vmatpush.msra.mxu0 0.0
    %264 = vmatpush.msra.mxu0 0.0
    %265 = vmatpush.msra.mxu0 0.0
    %266 = vmatpush.msra.mxu0 %v243
    %267 = vmatpush.msra.mxu0 %v242
    %268 = vmatmul.f32.gmra.mxu0 %v250
    %v269 = vpop.f32.mrf.mxu0
    %v270 = vadd.f32 %v247, %v269
    %271 = vdwg.mxu0
    %v272 = vadd.f32 %v270, %v70
    %v273 = vmax.f32 %v272, 0.0
    %274 = vst.msk [vmem:[#allocation6] sm:$0xff] %vm134, %v273
    %s275 = scalar_lea.vmem %s0, 8
    %v276 = vld [vmem:[%s275] sm:$0xff]
    %277 = vmatpush.msra.mxu0 0.0
    %278 = vmatpush.msra.mxu0 0.0
    %279 = vmatpush.msra.mxu0 0.0
    %280 = vmatpush.msra.mxu0 0.0
    %281 = vmatpush.msra.mxu0 0.0
    %282 = vmatpush.msra.mxu0 0.0
    %283 = vmatpush.msra.mxu0 0.0
    %284 = vmatpush.msra.mxu0 0.0
    %285 = vmatpush.msra.mxu0 0.0
    %286 = vmatpush.msra.mxu0 0.0
    %287 = vmatpush.msra.mxu0 0.0
    %288 = vmatpush.msra.mxu0 0.0
    %289 = vmatpush.msra.mxu0 0.0
    %290 = vmatpush.msra.mxu0 0.0
    %291 = vmatpush.msra.mxu0 0.0
    %292 = vmatpush.msra.mxu0 %v276
    %293 = vmatmul.f32.gmra.mxu0 %v83
    %v294 = vpop.f32.mrf.mxu0
    %v295 = vadd.f32 %v74, %v294
    %296 = vmatmul.f32.gmra.mxu0 %v86
    %v297 = vpop.f32.mrf.mxu0
    %v298 = vadd.f32 %v79, %v297
    %299 = vdwg.mxu0
    %v300 = vmax.f32 %v295, 0.0
    %v301 = vmax.f32 %v298, 0.0
    %304 = vrot.lane.b32.xlu0 %v300, 4
    %v305 = vpop.permute.xlu0 %304
    %306 = vrot.lane.b32.xlu0 %v301, 4
    %v307 = vpop.permute.xlu0 %306
    %s310 = scalar_lea.vmem [#allocation2], 16
    %311 = vst.msk [vmem:[%s310] sm:$0xff] %vm121, %v305
    %312 = vst.msk [vmem:[%s310 + $0x8] sm:$0xff] %vm121, %v307
    %v313 = vld [vmem:[%s310] sm:$0xff]
    %v314 = vld [vmem:[%s310 + $0x8] sm:$0xff]
    %317 = vrot.lane.b32.xlu0 %v313, 126
    %v318 = vpop.permute.xlu0 %317
    %319 = vrot.lane.b32.xlu0 %v314, 126
    %v320 = vpop.permute.xlu0 %319
    %323 = vmatpush.msra.mxu0 0.0
    %324 = vmatpush.msra.mxu0 0.0
    %325 = vmatpush.msra.mxu0 0.0
    %326 = vmatpush.msra.mxu0 0.0
    %327 = vmatpush.msra.mxu0 0.0
    %328 = vmatpush.msra.mxu0 0.0
    %329 = vmatpush.msra.mxu0 0.0
    %330 = vmatpush.msra.mxu0 0.0
    %331 = vmatpush.msra.mxu0 0.0
    %332 = vmatpush.msra.mxu0 0.0
    %333 = vmatpush.msra.mxu0 0.0
    %334 = vmatpush.msra.mxu0 0.0
    %335 = vmatpush.msra.mxu0 0.0
    %336 = vmatpush.msra.mxu0 0.0
    %337 = vmatpush.msra.mxu0 %v320
    %338 = vmatpush.msra.mxu0 %v318
    %339 = vmatmul.f32.gmra.mxu0 %v136
    %v340 = vpop.f32.mrf.mxu0
    %v341 = vadd.f32 0.0, %v340
    %342 = vmatmul.f32.gmra.mxu0 %v139
    %v343 = vpop.f32.mrf.mxu0
    %v344 = vadd.f32 0.0, %v343
    %345 = vdwg.mxu0
    %346 = vmatpush.msra.mxu0 0.0
    %347 = vmatpush.msra.mxu0 0.0
    %348 = vmatpush.msra.mxu0 0.0
    %349 = vmatpush.msra.mxu0 0.0
    %350 = vmatpush.msra.mxu0 0.0
    %351 = vmatpush.msra.mxu0 0.0
    %352 = vmatpush.msra.mxu0 0.0
    %353 = vmatpush.msra.mxu0 0.0
    %354 = vmatpush.msra.mxu0 0.0
    %355 = vmatpush.msra.mxu0 0.0
    %356 = vmatpush.msra.mxu0 0.0
    %357 = vmatpush.msra.mxu0 0.0
    %358 = vmatpush.msra.mxu0 0.0
    %359 = vmatpush.msra.mxu0 0.0
    %360 = vmatpush.msra.mxu0 %v314
    %361 = vmatpush.msra.mxu0 %v313
    %362 = vmatmul.f32.gmra.mxu0 %v165
    %v363 = vpop.f32.mrf.mxu0
    %v364 = vadd.f32 %v341, %v363
    %365 = vmatmul.f32.gmra.mxu0 %v168
    %v366 = vpop.f32.mrf.mxu0
    %v367 = vadd.f32 %v344, %v366
    %368 = vdwg.mxu0
    %369 = vrot.lane.b32.xlu0 %v313, 124
    %v370 = vpop.permute.xlu0 %369
    %371 = vrot.lane.b32.xlu0 %v314, 124
    %v372 = vpop.permute.xlu0 %371
    %375 = vmatpush.msra.mxu0 0.0
    %376 = vmatpush.msra.mxu0 0.0
    %377 = vmatpush.msra.mxu0 0.0
    %378 = vmatpush.msra.mxu0 0.0
    %379 = vmatpush.msra.mxu0 0.0
    %380 = vmatpush.msra.mxu0 0.0
    %381 = vmatpush.msra.mxu0 0.0
    %382 = vmatpush.msra.mxu0 0.0
    %383 = vmatpush.msra.mxu0 0.0
    %384 = vmatpush.msra.mxu0 0.0
    %385 = vmatpush.msra.mxu0 0.0
    %386 = vmatpush.msra.mxu0 0.0
    %387 = vmatpush.msra.mxu0 0.0
    %388 = vmatpush.msra.mxu0 0.0
    %389 = vmatpush.msra.mxu0 %v372
    %390 = vmatpush.msra.mxu0 %v370
    %391 = vmatmul.f32.gmra.mxu0 %v200
    %v392 = vpop.f32.mrf.mxu0
    %v393 = vadd.f32 0.0, %v392
    %394 = vmatmul.f32.gmra.mxu0 %v203
    %v395 = vpop.f32.mrf.mxu0
    %v396 = vadd.f32 0.0, %v395
    %397 = vdwg.mxu0
    %v398 = vadd.f32 %v364, %v393
    %v399 = vadd.f32 %v367, %v396
    %v400 = vadd.f32 %v398, %v233
    %v401 = vadd.f32 %v399, %v238
    %v402 = vmax.f32 %v400, 0.0
    %v403 = vmax.f32 %v401, 0.0
    %404 = vmatpush.msra.mxu0 0.0
    %405 = vmatpush.msra.mxu0 0.0
    %406 = vmatpush.msra.mxu0 0.0
    %407 = vmatpush.msra.mxu0 0.0
    %408 = vmatpush.msra.mxu0 0.0
    %409 = vmatpush.msra.mxu0 0.0
    %410 = vmatpush.msra.mxu0 0.0
    %411 = vmatpush.msra.mxu0 0.0
    %412 = vmatpush.msra.mxu0 0.0
    %413 = vmatpush.msra.mxu0 0.0
    %414 = vmatpush.msra.mxu0 0.0
    %415 = vmatpush.msra.mxu0 0.0
    %416 = vmatpush.msra.mxu0 0.0
    %417 = vmatpush.msra.mxu0 0.0
    %418 = vmatpush.msra.mxu0 %v403
    %419 = vmatpush.msra.mxu0 %v402
    %420 = vmatmul.f32.gmra.mxu0 %v250
    %v421 = vpop.f32.mrf.mxu0
    %v422 = vadd.f32 %v247, %v421
    %423 = vdwg.mxu0
    %v424 = vadd.f32 %v422, %v276
    %v425 = vmax.f32 %v424, 0.0
    %s426 = scalar_lea.vmem [#allocation6], 8
    %427 = vst.msk [vmem:[%s426] sm:$0xff] %vm134, %v425
    %s428 = sadd.s32 0, 1
    %p429 = scmp.lt.s32.totalorder %s428, 1
    // Predicated region
    $region46: #{tpu_custom_call.1} parent=1 // pred_check
      %p430 = pneg %p429
    $region47: #{tpu_custom_call.1} parent=1 // pred_check_branch
      %432 = sbr.rel (%p430) target = $region49
    $region48: #{tpu_custom_call.1} parent=1 // pred_region
      %v433 = vld [vmem:[#allocation2] sm:$0xff]
      %v434 = vld [vmem:[#allocation2 + $0x8] sm:$0xff]
      %v435 = vld [vmem:[#allocation2 + $0x10] sm:$0xff]
      %v436 = vld [vmem:[#allocation2 + $0x18] sm:$0xff]
      %441 = vrot.lane.b32.xlu0 %v433, 112
      %v442 = vpop.permute.xlu0 %441
      %443 = vrot.lane.b32.xlu0 %v434, 112
      %v444 = vpop.permute.xlu0 %443
      %445 = vrot.lane.b32.xlu0 %v435, 112
      %v446 = vpop.permute.xlu0 %445
      %447 = vrot.lane.b32.xlu0 %v436, 112
      %v448 = vpop.permute.xlu0 %447
      %vm453 = vcmask 31744
      %454 = vst.msk [vmem:[#allocation2] sm:$0xff] %vm453, %v442
      %455 = vst.msk [vmem:[#allocation2 + $0x8] sm:$0xff] %vm453, %v444
      %456 = vst.msk [vmem:[#allocation2 + $0x10] sm:$0xff] %vm453, %v446
      %457 = vst.msk [vmem:[#allocation2 + $0x18] sm:$0xff] %vm453, %v448
    $region49: #{tpu_custom_call.1} parent=1 // pred_fallthru
      _
    // Predicated region
    $region50: #{tpu_custom_call.1} parent=1 // pred_check
      _
    $region51: #{tpu_custom_call.1} parent=1 // pred_check_branch
      %459 = sbr.rel (0) target = $region53
    $region52: #{tpu_custom_call.1} parent=1 // pred_region
      %461 = vsyncadd [#allocation5], 0
      %s462 = sshll.u32 [#allocation6], 4
      %s463 = int_to_ptr.vmem [resolvable:$true] %s462
      %s464 = sshll.u32 %s9, 4
      %s465 = int_to_ptr.hbm [resolvable:$true] %s464
      %470 = dma.vmem_to_hbm [thread:$0]  %s463, 256, %s465, [#allocation5], 128, 128, 8
    $region53: #{tpu_custom_call.1} parent=1 // pred_fallthru
      _
    // Predicated region
    $region54: #{tpu_custom_call.1} parent=1 // pred_check
      _
    $region55: #{tpu_custom_call.1} parent=1 // pred_check_branch
      %472 = sbr.rel (0) target = $region57
    $region56: #{tpu_custom_call.1} parent=1 // pred_region
      %474 = dma.done [#allocation5], 256
    $region57: #{tpu_custom_call.1} parent=1 // pred_fallthru
      _
    %475 = vsyncpa [#allocation4], 1
    %476 = vsyncpa [#allocation5], 1

</llo_original>
